<compile_context>
chip_gen: v5e
topology: v5e:2x2
jax: 0.10.0
libtpu: 0.0.40
codegen_flags: <defaults>
</compile_context>

<pallas_src>
import jax
import jax.numpy as jnp
from jax.experimental import pallas as pl
from jax.experimental.pallas import tpu as pltpu

LANE = 128  # TPU vreg lane width


def discrete_action_kernel(stim_ref, args_t_ref, mask_ref,
                           weff_ref, beff_ref, wbias_ref, sbias_ref,
                           out_ref):
    tb = out_ref.shape[0]
    tn = out_ref.shape[1]
    h = weff_ref.shape[0]

    # --- folded key: kprime = stim @ (Wk Wv^T) + bk Wv^T  -- single MXU matmul,
    #     f32 operands (tiny + resident), f32 accumulation.
    kprime = jnp.dot(stim_ref[...], weff_ref[...],
                     preferred_element_type=jnp.float32) + beff_ref[...]      # (tb, H)

    # --- per-row scalar bias: k . bv = stim @ (Wk bv^T) + bk.bv
    #     (VPU multiply + XLU lane reduce; MXU not needed)
    kbias = (jnp.sum(stim_ref[...] * wbias_ref[...], axis=-1, keepdims=True)
             + sbias_ref[...])                                                # (tb, 1)

    # Hoisted lane-broadcast of kprime (JAX does not CSE broadcast_in_dim,
    # so don't re-broadcast inside the chunk loop).
    kp_b = jnp.broadcast_to(kprime[:, :, None], (tb, h, LANE))                # (tb, H, 128)

    mask_value = jnp.float32(jnp.finfo(jnp.float32).min)

    # --- lane-dense contraction over H (sublane axis): args^T tile is
    #     (tb, H, tn) with the candidate axis on lanes.  Process 128 lanes at
    #     a time so the f32 intermediate stays bounded in the register file.
    for c in range(tn // LANE):                         # static, fully unrolled
        lo, hi = c * LANE, (c + 1) * LANE
        a = args_t_ref[:, :, lo:hi].astype(jnp.float32)                       # (tb, H, 128)
        logits = jnp.sum(a * kp_b, axis=1) + kbias                            # (tb, 128)
        m = mask_ref[:, lo:hi]
        out_ref[:, lo:hi] = jnp.where(m != 0, logits, mask_value)


def discrete_action_forward(stim, args, mask, wk, bk, wv, bv,
                            *, block_b=8, block_n=512):
    B, H = stim.shape
    _, N, _ = args.shape

    # ---- wrapper-side f32 fold of the two linear layers (amortized across
    #      calls whenever the weights are reused; also improves accuracy).
    hp = jax.lax.Precision.HIGHEST
    w_eff = jnp.dot(wk, wv.T, precision=hp).astype(jnp.float32)     # (H, H)
    b_eff = jnp.dot(bk, wv.T, precision=hp).astype(jnp.float32)     # (1, H)
    w_bias = jnp.dot(wk, bv.T, precision=hp).T.astype(jnp.float32)  # (1, H)
    s_bias = jnp.dot(bk, bv.T, precision=hp).astype(jnp.float32)    # (1, 1)

    # ---- layout: candidate axis -> lanes (padded to 128), H -> sublanes.
    #      (Wrapper-side transpose is layout plumbing so the kernel's multiply,
    #       reduce and stores are all lane-dense.)
    n_pad = pl.cdiv(N, LANE) * LANE
    args_t = jnp.swapaxes(args, 1, 2)                                # (B, H, N)
    if n_pad != N:
        args_t = jnp.pad(args_t, ((0, 0), (0, 0), (0, n_pad - N)))
        mask = jnp.pad(mask, ((0, 0), (0, n_pad - N)))

    # ---- batch tiling: sublane-aligned tile; pad B (instead of one huge block)
    if B > block_b:
        tb = max(8, (block_b // 8) * 8)
        b_pad = pl.cdiv(B, tb) * tb
    else:
        tb, b_pad = B, B
    if b_pad != B:
        stim = jnp.pad(stim, ((0, b_pad - B), (0, 0)))
        args_t = jnp.pad(args_t, ((0, b_pad - B), (0, 0), (0, 0)))
        mask = jnp.pad(mask, ((0, b_pad - B), (0, 0)))

    # ---- candidate tile: largest 128-multiple dividing n_pad (<= block_n/512)
    cands = [c for c in (block_n, 512, 256, 128)
             if c % LANE == 0 and 0 < c <= n_pad and n_pad % c == 0]
    tn = max(cands) if cands else n_pad

    # ---- dtypes: bf16 only for the big streamed tensors (halves DMA bytes);
    #      tiny stim / resident weights stay f32.
    stim_f = stim.astype(jnp.float32)
    args_t_bf = args_t.astype(jnp.bfloat16)
    mask_bf = (mask != 0).astype(jnp.bfloat16)

    grid = (b_pad // tb, n_pad // tn)

    # VMEM budget: double-buffered streamed blocks + resident weights + headroom.
    vmem_bytes = (2 * (tb * H * 4 + tb * H * tn * 2 + tb * tn * 2 + tb * tn * 4)
                  + 2 * (H * H * 4 + 2 * H * 4 + 4) + (2 << 20))
    vmem_limit = int(min(max(vmem_bytes, 4 << 20), 32 << 20))

    cost = pl.CostEstimate(
        flops=int(2 * b_pad * H * H + 2 * b_pad * H + 2 * b_pad * n_pad * H),
        transcendentals=0,
        bytes_accessed=int(stim_f.size * 4 + args_t_bf.size * 2
                           + mask_bf.size * 2 + (H * H + 2 * H + 1) * 4
                           + b_pad * n_pad * 4))

    out_padded = pl.pallas_call(
        discrete_action_kernel,
        out_shape=jax.ShapeDtypeStruct((b_pad, n_pad), jnp.float32),
        grid=grid,
        in_specs=[
            pl.BlockSpec((tb, H), lambda i, j: (i, 0)),           # stim    (streamed)
            pl.BlockSpec((tb, H, tn), lambda i, j: (i, 0, j)),    # args^T  (streamed, lane-dense N)
            pl.BlockSpec((tb, tn), lambda i, j: (i, j)),          # mask    (streamed)
            pl.BlockSpec((H, H), lambda i, j: (0, 0)),            # W_eff   (resident)
            pl.BlockSpec((1, H), lambda i, j: (0, 0)),            # b_eff   (resident)
            pl.BlockSpec((1, H), lambda i, j: (0, 0)),            # w_bias  (resident)
            pl.BlockSpec((1, 1), lambda i, j: (0, 0)),            # s_bias  (resident)
        ],
        out_specs=pl.BlockSpec((tb, tn), lambda i, j: (i, j)),
        compiler_params=pltpu.CompilerParams(
            dimension_semantics=("parallel", "parallel"),
            vmem_limit_bytes=vmem_limit),
        cost_estimate=cost,
    )(stim_f, args_t_bf, mask_bf, w_eff, b_eff, w_bias, s_bias)

    return out_padded[:B, :N]


if __name__ == "__main__":
    B, N, H = 2, 8, 32   # batch, num candidate actions, hidden dim

    key = jax.random.PRNGKey(0)
    k_stim, k_args, k_mask, k_wk, k_bk, k_wv, k_bv = jax.random.split(key, 7)

    stim = jax.random.normal(k_stim, (B, H), dtype=jnp.float32)
    args = jax.random.normal(k_args, (B, N, H), dtype=jnp.float32)
    mask = (jax.random.uniform(k_mask, (B, N)) > 0.3).astype(jnp.int32)

    # deterministic synthetic parameters (not a checkpoint load)
    scale = 1.0 / jnp.sqrt(jnp.float32(H))
    wk = jax.random.normal(k_wk, (H, H), dtype=jnp.float32) * scale
    bk = jax.random.normal(k_bk, (1, H), dtype=jnp.float32) * 0.01
    wv = jax.random.normal(k_wv, (H, H), dtype=jnp.float32) * scale
    bv = jax.random.normal(k_bv, (1, H), dtype=jnp.float32) * 0.01

    out = discrete_action_forward(stim, args, mask, wk, bk, wv, bv)
    out = jax.block_until_ready(out)

    # pure-JAX f32 reference (HIGHEST precision so the TPU default matmul
    # precision doesn't contaminate the reference)
    hp = jax.lax.Precision.HIGHEST
    k_ref = jnp.dot(stim, wk, precision=hp) + bk                          # (B, H)
    v_ref = jnp.einsum('bnh,hk->bnk', args, wv, precision=hp) + bv[None]  # (B, N, H)
    logits_ref = jnp.sum(k_ref[:, None, :] * v_ref, axis=-1)
    mask_value = jnp.finfo(jnp.float32).min
    ref = jnp.where(mask != 0, logits_ref, mask_value)

    assert out.shape == (B, N) and out.dtype == jnp.float32
    # kernel streams args in bf16 (everything else f32) -> loose tolerance
    assert jnp.allclose(out, ref, rtol=5e-2, atol=5e-2), "mismatch vs reference"
    # masked entries must be exactly finfo(f32).min
    assert bool(jnp.all(jnp.where(mask == 0, out == mask_value, True)))
    print("KERNEL_OK")
</pallas_src>

<mosaic_0001>
module attributes {stable_mosaic.version = 11 : i64} {
  func.func @discrete_action_kernel(%arg0: i32, %arg1: i32, %arg2: memref<2x32xf32, #tpu.memory_space<vmem>>, %arg3: memref<2x32x128xbf16, #tpu.memory_space<vmem>>, %arg4: memref<2x128xbf16, #tpu.memory_space<vmem>>, %arg5: memref<32x32xf32, #tpu.memory_space<vmem>>, %arg6: memref<1x32xf32, #tpu.memory_space<vmem>>, %arg7: memref<1x32xf32, #tpu.memory_space<vmem>>, %arg8: memref<1x1xf32, #tpu.memory_space<vmem>>, %arg9: memref<2x128xf32, #tpu.memory_space<vmem>>) attributes {dimension_semantics = [#tpu.dimension_semantics<parallel>, #tpu.dimension_semantics<parallel>], iteration_bounds = array<i64: 1, 1>, scalar_prefetch = 0 : i64, scratch_operands = 0 : i64, tpu.core_type = #tpu.core_type<tc>, window_params = [{transform_indices = @transform_0, window_bounds = array<i64: 2, 32>}, {transform_indices = @transform_1, window_bounds = array<i64: 2, 32, 128>}, {transform_indices = @transform_2, window_bounds = array<i64: 2, 128>}, {pipeline_mode = #tpu.pipeline_mode<synchronous>, transform_indices = @transform_3, window_bounds = array<i64: 32, 32>}, {pipeline_mode = #tpu.pipeline_mode<synchronous>, transform_indices = @transform_4, window_bounds = array<i64: 1, 32>}, {pipeline_mode = #tpu.pipeline_mode<synchronous>, transform_indices = @transform_5, window_bounds = array<i64: 1, 32>}, {pipeline_mode = #tpu.pipeline_mode<synchronous>, transform_indices = @transform_6, window_bounds = array<i64: 1, 1>}, {transform_indices = @transform_7, window_bounds = array<i64: 2, 128>}]} {
    %c0 = arith.constant 0 : index
    %c0_0 = arith.constant 0 : index
    %0 = vector.load %arg2[%c0, %c0_0] : memref<2x32xf32, #tpu.memory_space<vmem>>, vector<2x32xf32>
    %c0_1 = arith.constant 0 : index
    %c0_2 = arith.constant 0 : index
    %1 = vector.load %arg5[%c0_1, %c0_2] : memref<32x32xf32, #tpu.memory_space<vmem>>, vector<32x32xf32>
    %cst = arith.constant dense<0.000000e+00> : vector<2x32xf32>
    %2 = tpu.matmul %0, %1, %cst {dimension_numbers = #tpu.dot_dimension_numbers<[1], [0], [0], [1], [0, 0, 1, 1], [], []>} : vector<2x32xf32>, vector<32x32xf32>, vector<2x32xf32> -> vector<2x32xf32>
    %c0_3 = arith.constant 0 : index
    %c0_4 = arith.constant 0 : index
    %3 = vector.load %arg6[%c0_3, %c0_4] : memref<1x32xf32, #tpu.memory_space<vmem>>, vector<1x32xf32>
    %4 = vector.broadcast %3 : vector<1x32xf32> to vector<2x32xf32>
    %5 = arith.addf %2, %4 : vector<2x32xf32>
    %c0_5 = arith.constant 0 : index
    %c0_6 = arith.constant 0 : index
    %6 = vector.load %arg2[%c0_5, %c0_6] : memref<2x32xf32, #tpu.memory_space<vmem>>, vector<2x32xf32>
    %c0_7 = arith.constant 0 : index
    %c0_8 = arith.constant 0 : index
    %7 = vector.load %arg7[%c0_7, %c0_8] : memref<1x32xf32, #tpu.memory_space<vmem>>, vector<1x32xf32>
    %8 = vector.broadcast %7 : vector<1x32xf32> to vector<2x32xf32>
    %9 = arith.mulf %6, %8 : vector<2x32xf32>
    %cst_9 = arith.constant dense<0.000000e+00> : vector<2xf32>
    %10 = vector.multi_reduction <add>, %9, %cst_9 [1] : vector<2x32xf32> to vector<2xf32>
    %11 = vector.shape_cast %10 : vector<2xf32> to vector<2x1xf32>
    %c0_10 = arith.constant 0 : index
    %c0_11 = arith.constant 0 : index
    %12 = vector.load %arg8[%c0_10, %c0_11] : memref<1x1xf32, #tpu.memory_space<vmem>>, vector<1x1xf32>
    %13 = vector.broadcast %12 : vector<1x1xf32> to vector<2x1xf32>
    %14 = arith.addf %11, %13 : vector<2x1xf32>
    %15 = vector.shape_cast %5 : vector<2x32xf32> to vector<2x32x1xf32>
    %16 = vector.shape_cast %15 : vector<2x32x1xf32> to vector<2x32x1xf32>
    %17 = vector.broadcast %16 : vector<2x32x1xf32> to vector<2x32x128xf32>
    %c0_12 = arith.constant 0 : index
    %c0_13 = arith.constant 0 : index
    %c0_14 = arith.constant 0 : index
    %18 = vector.load %arg3[%c0_12, %c0_13, %c0_14] : memref<2x32x128xbf16, #tpu.memory_space<vmem>>, vector<2x32x128xbf16>
    %19 = arith.extf %18 : vector<2x32x128xbf16> to vector<2x32x128xf32>
    %20 = arith.mulf %19, %17 : vector<2x32x128xf32>
    %cst_15 = arith.constant dense<0.000000e+00> : vector<2x128xf32>
    %21 = vector.multi_reduction <add>, %20, %cst_15 [1] : vector<2x32x128xf32> to vector<2x128xf32>
    %22 = vector.broadcast %14 : vector<2x1xf32> to vector<2x128xf32>
    %23 = arith.addf %21, %22 : vector<2x128xf32>
    %c0_16 = arith.constant 0 : index
    %c0_17 = arith.constant 0 : index
    %24 = vector.load %arg4[%c0_16, %c0_17] : memref<2x128xbf16, #tpu.memory_space<vmem>>, vector<2x128xbf16>
    %cst_18 = arith.constant 0.000000e+00 : bf16
    %25 = vector.broadcast %cst_18 : bf16 to vector<2x128xbf16>
    %26 = arith.cmpf one, %24, %25 : vector<2x128xbf16>
    %cst_19 = arith.constant -3.40282347E+38 : f32
    %27 = vector.broadcast %cst_19 : f32 to vector<2x128xf32>
    %28 = arith.select %26, %23, %27 : vector<2x128xi1>, vector<2x128xf32>
    %c0_20 = arith.constant 0 : index
    %c0_21 = arith.constant 0 : index
    %29 = vector.load %arg9[%c0_20, %c0_21] : memref<2x128xf32, #tpu.memory_space<vmem>>, vector<2x128xf32>
    tpu.vector_store %arg9[%c0_20, %c0_21], %28 {strides = array<i32>} : memref<2x128xf32, #tpu.memory_space<vmem>>, vector<2x128xf32>,
    return
  }
  func.func @transform_0(%arg0: i32, %arg1: i32) -> (i32, i32) {
    %c0_i32 = arith.constant 0 : i32
    %c0_i32_0 = arith.constant 0 : i32
    return %arg0, %c0_i32 : i32, i32
  }
  func.func @transform_1(%arg0: i32, %arg1: i32) -> (i32, i32, i32) {
    %c0_i32 = arith.constant 0 : i32
    %c0_i32_0 = arith.constant 0 : i32
    return %arg0, %c0_i32, %arg1 : i32, i32, i32
  }
  func.func @transform_2(%arg0: i32, %arg1: i32) -> (i32, i32) {
    %c0_i32 = arith.constant 0 : i32
    return %arg0, %arg1 : i32, i32
  }
  func.func @transform_3(%arg0: i32, %arg1: i32) -> (i32, i32) {
    %c0_i32 = arith.constant 0 : i32
    %c0_i32_0 = arith.constant 0 : i32
    %c0_i32_1 = arith.constant 0 : i32
    return %c0_i32, %c0_i32_0 : i32, i32
  }
  func.func @transform_4(%arg0: i32, %arg1: i32) -> (i32, i32) {
    %c0_i32 = arith.constant 0 : i32
    %c0_i32_0 = arith.constant 0 : i32
    %c0_i32_1 = arith.constant 0 : i32
    return %c0_i32, %c0_i32_0 : i32, i32
  }
  func.func @transform_5(%arg0: i32, %arg1: i32) -> (i32, i32) {
    %c0_i32 = arith.constant 0 : i32
    %c0_i32_0 = arith.constant 0 : i32
    %c0_i32_1 = arith.constant 0 : i32
    return %c0_i32, %c0_i32_0 : i32, i32
  }
  func.func @transform_6(%arg0: i32, %arg1: i32) -> (i32, i32) {
    %c0_i32 = arith.constant 0 : i32
    %c0_i32_0 = arith.constant 0 : i32
    %c0_i32_1 = arith.constant 0 : i32
    return %c0_i32, %c0_i32_0 : i32, i32
  }
  func.func @transform_7(%arg0: i32, %arg1: i32) -> (i32, i32) {
    %c0_i32 = arith.constant 0 : i32
    return %arg0, %arg1 : i32, i32
  }
}

</mosaic_0001>

<llo_original>
// kernel: tpu_custom_call.1
$region0: #{tpu_custom_call.1}
  #allocation0 [shape = 'u32[]', space=smem, size = 0x4, offset = 0x4, fixed_abs, tag = 'smem constant byte address 0x4 - core index']
  #allocation1 [shape = 'u32[72,128]{1,0:T(1,128)}', space=vmem, size = 0x9000, scoped, tag = 'internal scratch']
  #allocation2 [shape = 'f32[1,1]{1,0:T(1,128)S(1)}', space=vmem, size = 0x200, scoped, tag = 'scoped memory for tpu_custom_call.1']
  %s0 = inlined_call_operand.vmem [shape: f32[2,32], index: 0, kind: input, shape index: {}]
  %s1 = inlined_call_operand.hbm [shape: bf16[2,32,128], index: 1, kind: input, shape index: {}]
  %s2 = inlined_call_operand.vmem [shape: bf16[2,128], index: 2, kind: input, shape index: {}]
  %s3 = inlined_call_operand.hbm [shape: f32[32,32], index: 3, kind: input, shape index: {}]
  %s4 = inlined_call_operand.vmem [shape: f32[1,32], index: 4, kind: input, shape index: {}]
  %s5 = inlined_call_operand.vmem [shape: f32[1,32], index: 5, kind: input, shape index: {}]
  %s6 = inlined_call_operand.<no memory space> [shape: f32[1,1], index: 6, kind: input, shape index: {}]
  %s7 = inlined_call_operand.hbm [shape: f32[2,128], index: 7, kind: output, shape index: {}]
  %s8 = sld [smem:[#allocation0]]
  $region46: #{tpu_custom_call.1} parent=0
    _
  %s10 = ssub.s32 1, %s8
  %s11 = scalar_select 0, %s10, %s8
  %v12 = vstv %s6
  %13 = vst [vmem:[#allocation2] sm:$0x1] %v12
  $region1: #{tpu_custom_call.1} parent=0
    #allocation3 [shape = 'u8[16384]{0}', space=vmem, size = 0x4000, scoped, tag = 'input window, operand 1, single buffered']
    #allocation4 [shape = 's32[1]{0}', space=sflag, size = 0x4, scoped, tag = 'scoped memory for tpu_custom_call.1']
    #allocation5 [shape = 's32[1]{0}', space=sflag, size = 0x4, scoped, tag = 'scoped memory for tpu_custom_call.1']
    #allocation6 [shape = 'u8[16384]{0}', space=vmem, size = 0x4000, scoped, tag = 'input window, operand 3, single buffered']
    #allocation7 [shape = 's32[1]{0}', space=sflag, size = 0x4, scoped, tag = 'scoped memory for tpu_custom_call.1']
    #allocation8 [shape = 'u8[1024]{0}', space=vmem, size = 0x400, scoped, tag = 'output window, operand 0, single buffered']
    %14 = vsyncpa [#allocation4], 0
    %15 = vsyncpa [#allocation7], 0
    %16 = vsyncpa [#allocation5], 0
    // Predicated region
    $region2: #{tpu_custom_call.1} parent=1 // pred_check
      _
    $region3: #{tpu_custom_call.1} parent=1 // pred_check_branch
      %18 = sbr.rel (0) target = $region5
    $region4: #{tpu_custom_call.1} parent=1 // pred_region
      _
    $region5: #{tpu_custom_call.1} parent=1 // pred_fallthru
      _
    // Predicated region
    $region6: #{tpu_custom_call.1} parent=1 // pred_check
      _
    $region7: #{tpu_custom_call.1} parent=1 // pred_check_branch
      %20 = sbr.rel (0) target = $region9
    $region8: #{tpu_custom_call.1} parent=1 // pred_region
      %22 = vsyncadd [#allocation4], 0
      %s23 = sshll.u32 %s1, 4
      %s24 = int_to_ptr.hbm [resolvable:$true] %s23
      %s25 = sshll.u32 [#allocation3], 4
      %s26 = int_to_ptr.vmem [resolvable:$true] %s25
      %31 = dma.hbm_to_vmem [thread:$0]  %s24, 512, %s26, [#allocation4], 64, 64, 4
    $region9: #{tpu_custom_call.1} parent=1 // pred_fallthru
      _
    // Predicated region
    $region10: #{tpu_custom_call.1} parent=1 // pred_check
      _
    $region11: #{tpu_custom_call.1} parent=1 // pred_check_branch
      %33 = sbr.rel (0) target = $region13
    $region12: #{tpu_custom_call.1} parent=1 // pred_region
      _
    $region13: #{tpu_custom_call.1} parent=1 // pred_fallthru
      _
    // Predicated region
    $region14: #{tpu_custom_call.1} parent=1 // pred_check
      _
    $region15: #{tpu_custom_call.1} parent=1 // pred_check_branch
      %35 = sbr.rel (0) target = $region17
    $region16: #{tpu_custom_call.1} parent=1 // pred_region
      %37 = vsyncadd [#allocation7], 0
      %s38 = sshll.u32 %s3, 4
      %s39 = int_to_ptr.hbm [resolvable:$true] %s38
      %s40 = sshll.u32 [#allocation6], 4
      %s41 = int_to_ptr.vmem [resolvable:$true] %s40
      %46 = dma.hbm_to_vmem [thread:$0]  %s39, 512, %s41, [#allocation7], 128, 128, 8
    $region17: #{tpu_custom_call.1} parent=1 // pred_fallthru
      _
    // Predicated region
    $region18: #{tpu_custom_call.1} parent=1 // pred_check
      _
    $region19: #{tpu_custom_call.1} parent=1 // pred_check_branch
      %48 = sbr.rel (0) target = $region21
    $region20: #{tpu_custom_call.1} parent=1 // pred_region
      _
    $region21: #{tpu_custom_call.1} parent=1 // pred_fallthru
      _
    // Predicated region
    $region22: #{tpu_custom_call.1} parent=1 // pred_check
      _
    $region23: #{tpu_custom_call.1} parent=1 // pred_check_branch
      %50 = sbr.rel (0) target = $region25
    $region24: #{tpu_custom_call.1} parent=1 // pred_region
      _
    $region25: #{tpu_custom_call.1} parent=1 // pred_fallthru
      _
    // Predicated region
    $region26: #{tpu_custom_call.1} parent=1 // pred_check
      _
    $region27: #{tpu_custom_call.1} parent=1 // pred_check_branch
      %52 = sbr.rel (0) target = $region29
    $region28: #{tpu_custom_call.1} parent=1 // pred_region
      _
    $region29: #{tpu_custom_call.1} parent=1 // pred_fallthru
      _
    // Predicated region
    $region30: #{tpu_custom_call.1} parent=1 // pred_check
      _
    $region31: #{tpu_custom_call.1} parent=1 // pred_check_branch
      %54 = sbr.rel (0) target = $region33
    $region32: #{tpu_custom_call.1} parent=1 // pred_region
      %56 = dma.done [#allocation4], 512
    $region33: #{tpu_custom_call.1} parent=1 // pred_fallthru
      _
    // Predicated region
    $region34: #{tpu_custom_call.1} parent=1 // pred_check
      _
    $region35: #{tpu_custom_call.1} parent=1 // pred_check_branch
      %58 = sbr.rel (0) target = $region37
    $region36: #{tpu_custom_call.1} parent=1 // pred_region
      %60 = dma.done [#allocation7], 512
    $region37: #{tpu_custom_call.1} parent=1 // pred_fallthru
      _
    %v61 = vld [vmem:[%s0] sm:$0x3]
    %v62 = vld [vmem:[#allocation6] sm:$0xff]
    %v63 = vld [vmem:[#allocation6 + $0x8] sm:$0xff]
    %v64 = vld [vmem:[#allocation6 + $0x10] sm:$0xff]
    %v65 = vld [vmem:[#allocation6 + $0x18] sm:$0xff]
    %v66 = vld [vmem:[%s4] sm:$0x1]
    %v68 = vperm.slane %v66, 0
    %vm70 = vcmask 261120
    %v72 = vsel %vm70, %v61, 0
    %74 = vmatpush.msra.mxu0 0.0
    %75 = vmatpush.msra.mxu0 0.0
    %76 = vmatpush.msra.mxu0 0.0
    %77 = vmatpush.msra.mxu0 0.0
    %78 = vmatpush.msra.mxu0 0.0
    %79 = vmatpush.msra.mxu0 0.0
    %80 = vmatpush.msra.mxu0 0.0
    %81 = vmatpush.msra.mxu0 0.0
    %82 = vmatpush.msra.mxu0 0.0
    %83 = vmatpush.msra.mxu0 0.0
    %84 = vmatpush.msra.mxu0 0.0
    %85 = vmatpush.msra.mxu0 0.0
    %86 = vmatpush.msra.mxu0 %v65
    %87 = vmatpush.msra.mxu0 %v64
    %88 = vmatpush.msra.mxu0 %v63
    %89 = vmatpush.msra.mxu0 %v62
    %90 = vmatmul.f32.gmra.mxu0 %v72
    %v91 = vpop.f32.mrf.mxu0
    %v92 = vadd.f32 %v68, %v91
    %93 = vdwg.mxu0
    %v94 = vld [vmem:[%s5] sm:$0x1]
    %v96 = vperm.slane %v94, 0
    %v98 = vmul.f32 %v61, %v96
    %vm99 = vcmask 254976
    %v100 = vsel %vm99, %v98, 0.0
    %101 = vadd.xlane.f32.xlu0 %v100
    %v102 = vpop.xlane.xlu0 %101
    %v103 = vld [vmem:[#allocation2] sm:$0x1]
    %v105 = vperm.slane %v103, 0
    %v107 = vadd.f32 %v102, %v105
    %v108 = vperm.slane %v92, 0
    %v109 = vlaneseq
    %v110 = vshrl.u32 %v109, 7
    %112 = vset.pattern.permute.xlu0 %v110
    %113 = vperm.xlu0 %112, %v108
    %v114 = vpop.permute.xlu0 %113
    %v115 = vlaneseq
    %v116 = vshrl.u32 %v115, 7
    %v117 = vadd.s32 %v116, 8
    %118 = vset.pattern.permute.xlu0 %v117
    %119 = vperm.xlu0 %118, %v108
    %v120 = vpop.permute.xlu0 %119
    %v121 = vlaneseq
    %v122 = vshrl.u32 %v121, 7
    %v123 = vadd.s32 %v122, 16
    %124 = vset.pattern.permute.xlu0 %v123
    %125 = vperm.xlu0 %124, %v108
    %v126 = vpop.permute.xlu0 %125
    %v127 = vlaneseq
    %v128 = vshrl.u32 %v127, 7
    %v129 = vadd.s32 %v128, 24
    %130 = vset.pattern.permute.xlu0 %v129
    %131 = vperm.xlu0 %130, %v108
    %v132 = vpop.permute.xlu0 %131
    %v133 = vperm.slane %v92, 1
    %v134 = vlaneseq
    %v135 = vshrl.u32 %v134, 7
    %137 = vset.pattern.permute.xlu0 %v135
    %138 = vperm.xlu0 %137, %v133
    %v139 = vpop.permute.xlu0 %138
    %v140 = vlaneseq
    %v141 = vshrl.u32 %v140, 7
    %v142 = vadd.s32 %v141, 8
    %143 = vset.pattern.permute.xlu0 %v142
    %144 = vperm.xlu0 %143, %v133
    %v145 = vpop.permute.xlu0 %144
    %v146 = vlaneseq
    %v147 = vshrl.u32 %v146, 7
    %v148 = vadd.s32 %v147, 16
    %149 = vset.pattern.permute.xlu0 %v148
    %150 = vperm.xlu0 %149, %v133
    %v151 = vpop.permute.xlu0 %150
    %v152 = vlaneseq
    %v153 = vshrl.u32 %v152, 7
    %v154 = vadd.s32 %v153, 24
    %155 = vset.pattern.permute.xlu0 %v154
    %156 = vperm.xlu0 %155, %v133
    %v157 = vpop.permute.xlu0 %156
    %v158 = vld [vmem:[#allocation3] sm:$0xf]
    %v159 = vld [vmem:[#allocation3 + $0x4] sm:$0xf]
    %v160 = vld [vmem:[#allocation3 + $0x8] sm:$0xf]
    %v161 = vld [vmem:[#allocation3 + $0xc] sm:$0xf]
    %v162 = vld [vmem:[#allocation3 + $0x10] sm:$0xf]
    %v163 = vld [vmem:[#allocation3 + $0x14] sm:$0xf]
    %v164 = vld [vmem:[#allocation3 + $0x18] sm:$0xf]
    %v165 = vld [vmem:[#allocation3 + $0x1c] sm:$0xf]
    %v166 = vunpack.c.l.bf16 %v158
    %v167 = vunpack.c.l.bf16 %v159
    %v168 = vunpack.c.l.bf16 %v160
    %v169 = vunpack.c.l.bf16 %v161
    %v170 = vunpack.c.l.bf16 %v162
    %v171 = vunpack.c.l.bf16 %v163
    %v172 = vunpack.c.l.bf16 %v164
    %v173 = vunpack.c.l.bf16 %v165
    %v174 = vmul.f32 %v166, %v114
    %v175 = vmul.f32 %v167, %v120
    %v176 = vmul.f32 %v168, %v126
    %v177 = vmul.f32 %v169, %v132
    %v178 = vmul.f32 %v170, %v139
    %v179 = vmul.f32 %v171, %v145
    %v180 = vmul.f32 %v172, %v151
    %v181 = vmul.f32 %v173, %v157
    %v182 = vadd.f32 %v174, %v175
    %v183 = vadd.f32 %v182, %v176
    %v184 = vadd.f32 %v183, %v177
    %v185 = vrot.slane %v184, 4
    %v186 = vadd.f32 %v184, %v185
    %v187 = vrot.slane %v186, 2
    %v188 = vadd.f32 %v186, %v187
    %v189 = vrot.slane %v188, 1
    %v190 = vadd.f32 %v188, %v189
    %v191 = vadd.f32 %v178, %v179
    %v192 = vadd.f32 %v191, %v180
    %v193 = vadd.f32 %v192, %v181
    %v194 = vrot.slane %v193, 4
    %v195 = vadd.f32 %v193, %v194
    %v196 = vrot.slane %v195, 2
    %v197 = vadd.f32 %v195, %v196
    %v198 = vrot.slane %v197, 1
    %v199 = vadd.f32 %v197, %v198
    %201 = vset.pattern.permute.xlu0 0
    %202 = vperm.xlu0 %201, %v107
    %v203 = vpop.permute.xlu0 %202
    %v204 = vrot.slane %v203, 1
    %v207 = vadd.f32 %v190, %v203
    %v208 = vadd.f32 %v199, %v204
    %v209 = vld [vmem:[%s2] sm:$0x1]
    %v210 = vunpack.c.l.bf16 %v209
    %vm211 = vcmp.ne.f32.partialorder %v210, 0.0
    %vm214 = vcmask 1044484
    %v215 = vsel %vm214, %v207, %v207
    %vm216 = vcmask 1046534
    %v217 = vsel %vm216, %v207, %v215
    %v218 = vrot.slane %v208, 7
    %vm219 = vcmask 1041409
    %v220 = vsel %vm219, %v218, %v217
    %vm221 = vcmask 1043459
    %v222 = vsel %vm221, %v218, %v220
    %vm223 = vcmask 1045509
    %v224 = vsel %vm223, %v218, %v222
    %vm225 = vcmask 1047559
    %v226 = vsel %vm225, %v218, %v224
    %v228 = vsel %vm211, %v226, -3.4028235e+38
    %229 = vst [vmem:[#allocation8] sm:$0x3] %v228
    // Predicated region
    $region38: #{tpu_custom_call.1} parent=1 // pred_check
      _
    $region39: #{tpu_custom_call.1} parent=1 // pred_check_branch
      %231 = sbr.rel (0) target = $region41
    $region40: #{tpu_custom_call.1} parent=1 // pred_region
      %233 = vsyncadd [#allocation5], 0
      %s235 = sshll.u32 [#allocation8], 4
      %s236 = int_to_ptr.vmem [resolvable:$true] %s235
      %s237 = sshll.u32 %s7, 4
      %s238 = int_to_ptr.hbm [resolvable:$true] %s237
      %240 = dma.vmem_to_hbm [thread:$0]  %s236, 32, %s238, [#allocation5]
    $region41: #{tpu_custom_call.1} parent=1 // pred_fallthru
      _
    // Predicated region
    $region42: #{tpu_custom_call.1} parent=1 // pred_check
      _
    $region43: #{tpu_custom_call.1} parent=1 // pred_check_branch
      %242 = sbr.rel (0) target = $region45
    $region44: #{tpu_custom_call.1} parent=1 // pred_region
      %244 = dma.done [#allocation5], 32
    $region45: #{tpu_custom_call.1} parent=1 // pred_fallthru
      _
    %245 = vsyncpa [#allocation4], 1
    %246 = vsyncpa [#allocation7], 1
    %247 = vsyncpa [#allocation5], 1

</llo_original>
